<compile_context>
chip_gen: v7x
topology: tpu7x:2x2x1
jax: 0.10.0
libtpu: 0.0.40
codegen_flags: <defaults>
</compile_context>

<pallas_src>
import math

import jax
import jax.numpy as jnp
from jax.experimental import pallas as pl
from jax.experimental.pallas import tpu as pltpu


def _round_up(x: int, m: int) -> int:
    return ((x + m - 1) // m) * m


def _vmem_capacity_bytes() -> int:
    try:
        return int(pltpu.get_tpu_info().vmem_capacity_bytes)
    except Exception:
        return 64 << 20  # conservative default (v7x has the smallest VMEM)


# ----------------------------- kernels ---------------------------------------

def _make_kernel(*, probs: bool, num_actions: int, k_steps: int):
    """Fused linear (+ optional softmax) kernel factory."""

    def epilogue(s, b_ref, o_ref):
        # s: (tm, n_pad) f32.  Bias is 0 on real columns, -1e30 on padded
        # columns (so exp() drives them to exactly 0 in the softmax).
        s = s + b_ref[...]
        if probs:
            m = jnp.max(s, axis=-1, keepdims=True)
            s = jnp.exp(s - m)                       # reuse s: one live f32 buffer
            denom = jnp.sum(s, axis=-1, keepdims=True)
            s = s * pl.reciprocal(denom, approx=True)
        # True-width store: no wrapper-side slice pass, fewer HBM bytes.
        o_ref[...] = s[:, :num_actions].astype(o_ref.dtype)

    if k_steps == 1:
        def kernel(x_ref, w_ref, b_ref, o_ref):
            acc = jnp.dot(x_ref[...].astype(jnp.bfloat16), w_ref[...],
                          preferred_element_type=jnp.float32)
            epilogue(acc, b_ref, o_ref)
        return kernel

    # K-tiled fallback (huge input_dim): f32 accumulator, init/finalize via pl.when.
    def kernel(x_ref, w_ref, b_ref, o_ref, acc_ref):
        kk = pl.program_id(1)

        @pl.when(kk == 0)
        def _():
            acc_ref[...] = jnp.zeros_like(acc_ref)

        acc_ref[...] += jnp.dot(x_ref[...].astype(jnp.bfloat16), w_ref[...],
                                preferred_element_type=jnp.float32)

        @pl.when(kk == k_steps - 1)
        def _():
            epilogue(acc_ref[...], b_ref, o_ref)

    return kernel


# ----------------------------- wrapper ---------------------------------------

class ActionHead:
    """JAX/Pallas port of the PyTorch ActionHead module."""

    def __init__(self, input_dim: int, num_actions: int, temperature: float = 1.0,
                 key: jax.Array | None = None, out_dtype=jnp.float32):
        self.input_dim = input_dim
        self.num_actions = num_actions
        self.temperature = float(temperature)
        self.out_dtype = out_dtype
        self.n_pad = _round_up(num_actions, 128)   # lane-dense MXU output width

        # Generation-aware VMEM budget (v7x: 64 MiB physical -> 32 MiB budget).
        self._vmem_budget = min(_vmem_capacity_bytes() // 2, 64 << 20)

        # Resident-weight scheme unless the double-buffered (K, n_pad) bf16
        # weight would eat more than half the budget; then tile K instead.
        w_bytes = input_dim * self.n_pad * 2
        if 2 * w_bytes <= self._vmem_budget // 2:
            self.tk, self.k_steps = input_dim, 1
        else:
            tk = max(128, ((self._vmem_budget // 8) // (self.n_pad * 2)) // 128 * 128)
            self.tk = tk
            self.k_steps = -(-input_dim // tk)
        self.k_total = self.tk * self.k_steps      # == input_dim when k_steps == 1

        if key is None:
            key = jax.random.PRNGKey(0)
        # torch: nn.init.xavier_uniform_(weight, gain=0.01); weight is (num_actions, input_dim)
        gain = 0.01
        bound = gain * math.sqrt(6.0 / (input_dim + num_actions))
        w = jax.random.uniform(key, (num_actions, input_dim), dtype=jnp.float32,
                               minval=-bound, maxval=bound)

        # Stored pre-transposed & zero-padded to (k_total, n_pad); bf16 MXU operand.
        w_t = (jnp.zeros((self.k_total, self.n_pad), jnp.float32)
               .at[:input_dim, :num_actions].set(w.T))
        self.w_t = w_t.astype(jnp.bfloat16)                               # logits path
        self.w_t_scaled = (w_t / self.temperature).astype(jnp.bfloat16)   # probs / sampling

        # Bias: torch init is constant 0 on real columns; padded columns get
        # -1e30 so they contribute exactly 0 to the softmax.  (Logits path
        # slices padded columns off before the store, so the value there is
        # irrelevant for logits; bias/T == bias since the real bias is 0.)
        col = jnp.arange(self.n_pad)
        self.bias = jnp.where(col[None, :] < num_actions, 0.0, -1e30).astype(jnp.float32)

    # -- core forward ----------------------------------------------------------

    def _forward(self, x: jax.Array, *, probs: bool, scaled: bool) -> jax.Array:
        assert x.ndim == 2 and x.shape[1] == self.input_dim
        batch = x.shape[0]
        na, n_pad, tk, k_steps = self.num_actions, self.n_pad, self.tk, self.k_steps
        out_bytes = jnp.dtype(self.out_dtype).itemsize

        w = self.w_t_scaled if (probs or scaled) else self.w_t
        x = x.astype(jnp.float32)

        # K-tiling fallback only: pad x columns so every (tm, tk) block is valid.
        if k_steps > 1 and self.k_total != self.input_dim:
            x = jnp.pad(x, ((0, 0), (0, self.k_total - self.input_dim)))

        # Batch tile: up to 512 rows, shrunk to the VMEM budget (including f32
        # softmax temporaries); single-tile batches use round_up(batch, 8), and
        # large batches get >= 2 grid steps ("parallel" -> both v7x TCs).
        per_row = (2 * (tk * 4 + na * out_bytes)          # double-buffered x/out tiles
                   + 3 * n_pad * 4                        # f32 softmax temporaries
                   + (n_pad * 4 if k_steps > 1 else 0))   # accumulator scratch
        fixed = 2 * (tk * n_pad * 2) + 2 * n_pad * 4      # weight + bias buffers
        tm_cap = max(8, ((self._vmem_budget - fixed) // per_row) // 8 * 8)
        tm = max(8, min(512, _round_up(batch, 8), tm_cap))
        nb = (batch + tm - 1) // tm   # ragged last tile: OOB rows dropped on write

        kernel = _make_kernel(probs=probs, num_actions=na, k_steps=k_steps)

        vmem_need = fixed + tm * per_row
        vmem_limit = int(min(max(2 * vmem_need, 8 << 20), self._vmem_budget))

        cost = pl.CostEstimate(
            flops=2 * batch * self.k_total * n_pad,
            transcendentals=(batch * n_pad) if probs else 0,
            bytes_accessed=(batch * self.k_total * 4       # x (f32)
                            + self.k_total * n_pad * 2     # weight (bf16)
                            + n_pad * 4                    # bias (f32)
                            + batch * na * out_bytes),     # output
        )

        if k_steps == 1:
            grid = (nb,)
            in_specs = [
                pl.BlockSpec((tm, tk), lambda i: (i, 0)),       # streamed f32 x tile
                pl.BlockSpec((tk, n_pad), lambda i: (0, 0)),    # resident bf16 weight
                pl.BlockSpec((1, n_pad), lambda i: (0, 0)),     # resident bias
            ]
            out_specs = pl.BlockSpec((tm, na), lambda i: (i, 0))
            scratch_shapes = ()
            dims = ("parallel",)
        else:
            grid = (nb, k_steps)                                # reduction axis last
            in_specs = [
                pl.BlockSpec((tm, tk), lambda i, k: (i, k)),
                pl.BlockSpec((tk, n_pad), lambda i, k: (k, 0)),
                pl.BlockSpec((1, n_pad), lambda i, k: (0, 0)),
            ]
            out_specs = pl.BlockSpec((tm, na), lambda i, k: (i, 0))
            scratch_shapes = (pltpu.VMEM((tm, n_pad), jnp.float32),)
            dims = ("parallel", "arbitrary")

        return pl.pallas_call(
            kernel,
            out_shape=jax.ShapeDtypeStruct((batch, na), self.out_dtype),
            grid=grid,
            in_specs=in_specs,
            out_specs=out_specs,
            scratch_shapes=scratch_shapes,
            compiler_params=pltpu.CompilerParams(
                dimension_semantics=dims,
                vmem_limit_bytes=vmem_limit,
            ),
            cost_estimate=cost,
        )(x, w, self.bias)

    # -- public API (mirrors the PyTorch module) -------------------------------

    def __call__(self, x: jax.Array, return_probs: bool = False) -> jax.Array:
        return self._forward(x, probs=return_probs, scaled=False)

    def sample_action(self, x: jax.Array, key: jax.Array) -> jax.Array:
        # torch.multinomial(softmax(logits/T), 1) == categorical over logits/T.
        # Run the kernel with the temperature-folded weights so there is no
        # softmax pass and no wrapper-side divide.
        scaled_logits = self._forward(x, probs=False, scaled=True)
        return jax.random.categorical(key, scaled_logits.astype(jnp.float32), axis=-1)


# ----------------------------- demo / check ----------------------------------

if __name__ == "__main__":
    key = jax.random.PRNGKey(0)
    k_param, k_x, k_samp = jax.random.split(key, 3)

    batch, input_dim, num_actions = 8, 32, 16
    head = ActionHead(input_dim, num_actions, temperature=1.5, key=k_param)

    x = jax.random.normal(k_x, (batch, input_dim), dtype=jnp.float32)

    logits = head(x, return_probs=False)
    probs = head(x, return_probs=True)
    actions = head.sample_action(x, k_samp)
    jax.block_until_ready((logits, probs, actions))

    # Reference in plain JAX using identical bf16 MXU operands.
    x_bf = x.astype(jnp.bfloat16)
    ref_logits = jnp.dot(x_bf, head.w_t[:input_dim, :num_actions],
                         preferred_element_type=jnp.float32)        # bias == 0
    ref_scaled = jnp.dot(x_bf, head.w_t_scaled[:input_dim, :num_actions],
                         preferred_element_type=jnp.float32)
    ref_probs = jax.nn.softmax(ref_scaled, axis=-1)

    assert logits.shape == (batch, num_actions)
    assert probs.shape == (batch, num_actions)
    assert jnp.allclose(logits, ref_logits, atol=1e-4), "logits mismatch"
    assert jnp.allclose(probs, ref_probs, atol=2e-3), "probs mismatch"
    assert jnp.allclose(jnp.sum(probs, axis=-1), 1.0, atol=2e-3), "probs don't sum to 1"
    assert actions.shape == (batch,)
    assert bool(jnp.all((actions >= 0) & (actions < num_actions)))

    print("KERNEL_OK")
</pallas_src>

<mosaic_0001>
module attributes {stable_mosaic.version = 11 : i64} {
  func.func @kernel(%arg0: i32, %arg1: memref<8x32xf32, #tpu.memory_space<vmem>>, %arg2: memref<32x128xbf16, #tpu.memory_space<vmem>>, %arg3: memref<1x128xf32, #tpu.memory_space<vmem>>, %arg4: memref<8x16xf32, #tpu.memory_space<vmem>>) attributes {dimension_semantics = [#tpu.dimension_semantics<parallel>], iteration_bounds = array<i64: 1>, scalar_prefetch = 0 : i64, scratch_operands = 0 : i64, tpu.core_type = #tpu.core_type<tc>, window_params = [{transform_indices = @transform_0, window_bounds = array<i64: 8, 32>}, {pipeline_mode = #tpu.pipeline_mode<synchronous>, transform_indices = @transform_1, window_bounds = array<i64: 32, 128>}, {pipeline_mode = #tpu.pipeline_mode<synchronous>, transform_indices = @transform_2, window_bounds = array<i64: 1, 128>}, {transform_indices = @transform_3, window_bounds = array<i64: 8, 16>}]} {
    %c0 = arith.constant 0 : index
    %c0_0 = arith.constant 0 : index
    %0 = vector.load %arg1[%c0, %c0_0] : memref<8x32xf32, #tpu.memory_space<vmem>>, vector<8x32xf32>
    %1 = arith.truncf %0 : vector<8x32xf32> to vector<8x32xbf16>
    %c0_1 = arith.constant 0 : index
    %c0_2 = arith.constant 0 : index
    %2 = vector.load %arg2[%c0_1, %c0_2] : memref<32x128xbf16, #tpu.memory_space<vmem>>, vector<32x128xbf16>
    %cst = arith.constant dense<0.000000e+00> : vector<8x128xf32>
    %3 = tpu.matmul %1, %2, %cst {dimension_numbers = #tpu.dot_dimension_numbers<[1], [0], [0], [1], [0, 0, 1, 1], [], []>} : vector<8x32xbf16>, vector<32x128xbf16>, vector<8x128xf32> -> vector<8x128xf32>
    %c0_3 = arith.constant 0 : index
    %c0_4 = arith.constant 0 : index
    %4 = vector.load %arg3[%c0_3, %c0_4] : memref<1x128xf32, #tpu.memory_space<vmem>>, vector<1x128xf32>
    %5 = vector.broadcast %4 : vector<1x128xf32> to vector<8x128xf32>
    %6 = arith.addf %3, %5 : vector<8x128xf32>
    %7 = vector.extract_strided_slice %6 {offsets = [0, 0], sizes = [8, 16], strides = [1, 1]} : vector<8x128xf32> to vector<8x16xf32>
    %c0_5 = arith.constant 0 : index
    %c0_6 = arith.constant 0 : index
    %8 = vector.load %arg4[%c0_5, %c0_6] : memref<8x16xf32, #tpu.memory_space<vmem>>, vector<8x16xf32>
    tpu.vector_store %arg4[%c0_5, %c0_6], %7 {strides = array<i32>} : memref<8x16xf32, #tpu.memory_space<vmem>>, vector<8x16xf32>,
    return
  }
  func.func @transform_0(%arg0: i32) -> (i32, i32) {
    %c0_i32 = arith.constant 0 : i32
    %c0_i32_0 = arith.constant 0 : i32
    return %arg0, %c0_i32 : i32, i32
  }
  func.func @transform_1(%arg0: i32) -> (i32, i32) {
    %c0_i32 = arith.constant 0 : i32
    %c0_i32_0 = arith.constant 0 : i32
    %c0_i32_1 = arith.constant 0 : i32
    return %c0_i32, %c0_i32_0 : i32, i32
  }
  func.func @transform_2(%arg0: i32) -> (i32, i32) {
    %c0_i32 = arith.constant 0 : i32
    %c0_i32_0 = arith.constant 0 : i32
    %c0_i32_1 = arith.constant 0 : i32
    return %c0_i32, %c0_i32_0 : i32, i32
  }
  func.func @transform_3(%arg0: i32) -> (i32, i32) {
    %c0_i32 = arith.constant 0 : i32
    %c0_i32_0 = arith.constant 0 : i32
    return %arg0, %c0_i32 : i32, i32
  }
}

</mosaic_0001>

<llo_original>
// kernel: tpu_custom_call.1
$region0: #{tpu_custom_call.1}
  #allocation0 [shape = 'u32[]', space=smem, size = 0x4, offset = 0x4, fixed_abs, tag = 'smem constant byte address 0x4 - core index']
  #allocation1 [shape = 'u32[144,128]{1,0:T(1,128)}', space=vmem, size = 0x12000, scoped, tag = 'internal scratch']
  %s0 = inlined_call_operand.hbm [shape: f32[8,32], index: 0, kind: input, shape index: {}]
  %s1 = inlined_call_operand.hbm [shape: bf16[32,128], index: 1, kind: input, shape index: {}]
  %s2 = inlined_call_operand.vmem [shape: f32[1,128], index: 2, kind: input, shape index: {}]
  %s3 = inlined_call_operand.hbm [shape: f32[8,16], index: 3, kind: output, shape index: {}]
  %s4 = sld [smem:[#allocation0]]
  $region30: #{tpu_custom_call.1} parent=0
    _
  %s6 = ssub.s32 1, %s4
  %s7 = scalar_select 0, %s6, %s4
  $region1: #{tpu_custom_call.1} parent=0
    #allocation2 [shape = 'u8[4096]{0}', space=vmem, size = 0x1000, scoped, tag = 'input window, operand 0, single buffered']
    #allocation3 [shape = 's32[1]{0}', space=sflag, size = 0x4, scoped, tag = 'scoped memory for tpu_custom_call.1']
    #allocation4 [shape = 's32[1]{0}', space=sflag, size = 0x4, scoped, tag = 'scoped memory for tpu_custom_call.1']
    #allocation5 [shape = 'u8[8192]{0}', space=vmem, size = 0x2000, scoped, tag = 'input window, operand 1, single buffered']
    #allocation6 [shape = 's32[1]{0}', space=sflag, size = 0x4, scoped, tag = 'scoped memory for tpu_custom_call.1']
    #allocation7 [shape = 'u8[4096]{0}', space=vmem, size = 0x1000, scoped, tag = 'output window, operand 0, single buffered']
    %8 = vsyncpa [#allocation3], 0
    %9 = vsyncpa [#allocation6], 0
    %10 = vsyncpa [#allocation4], 0
    // Predicated region
    $region2: #{tpu_custom_call.1} parent=1 // pred_check
      _
    $region3: #{tpu_custom_call.1} parent=1 // pred_check_branch
      %12 = sbr.rel (0) target = $region5
    $region4: #{tpu_custom_call.1} parent=1 // pred_region
      %s14 = ssub.s32 128, 128
      %15 = vsyncadd [#allocation3], %s14
      %s17 = sshll.u32 [#allocation2], 4
      %s18 = int_to_ptr.vmem [resolvable:$true] %s17
      %20 = dma.hbm_to_vmem [thread:$0]  %s0, 128, %s18, [#allocation3]
    $region5: #{tpu_custom_call.1} parent=1 // pred_fallthru
      _
    // Predicated region
    $region6: #{tpu_custom_call.1} parent=1 // pred_check
      _
    $region7: #{tpu_custom_call.1} parent=1 // pred_check_branch
      %22 = sbr.rel (0) target = $region9
    $region8: #{tpu_custom_call.1} parent=1 // pred_region
      %s24 = ssub.s32 256, 256
      %25 = vsyncadd [#allocation6], %s24
      %s26 = sshll.u32 [#allocation5], 4
      %s27 = int_to_ptr.vmem [resolvable:$true] %s26
      %32 = dma.hbm_to_vmem [thread:$0]  %s1, 256, %s27, [#allocation6], 64, 64, 4
    $region9: #{tpu_custom_call.1} parent=1 // pred_fallthru
      _
    // Predicated region
    $region10: #{tpu_custom_call.1} parent=1 // pred_check
      _
    $region11: #{tpu_custom_call.1} parent=1 // pred_check_branch
      %34 = sbr.rel (0) target = $region13
    $region12: #{tpu_custom_call.1} parent=1 // pred_region
      _
    $region13: #{tpu_custom_call.1} parent=1 // pred_fallthru
      _
    // Predicated region
    $region14: #{tpu_custom_call.1} parent=1 // pred_check
      _
    $region15: #{tpu_custom_call.1} parent=1 // pred_check_branch
      %36 = sbr.rel (0) target = $region17
    $region16: #{tpu_custom_call.1} parent=1 // pred_region
      %37 = dma.done [#allocation3], 128
    $region17: #{tpu_custom_call.1} parent=1 // pred_fallthru
      _
    // Predicated region
    $region18: #{tpu_custom_call.1} parent=1 // pred_check
      _
    $region19: #{tpu_custom_call.1} parent=1 // pred_check_branch
      %39 = sbr.rel (0) target = $region21
    $region20: #{tpu_custom_call.1} parent=1 // pred_region
      %40 = dma.done [#allocation6], 256
    $region21: #{tpu_custom_call.1} parent=1 // pred_fallthru
      _
    %v42 = vld [vmem:[#allocation2] sm:$0xff]
    %v43 = vpack.c.bf16 %v42, %v42
    %v44 = vld [vmem:[#allocation5] sm:$0xf]
    %v45 = vld [vmem:[#allocation5 + $0x4] sm:$0xf]
    %v46 = vld [vmem:[#allocation5 + $0x8] sm:$0xf]
    %v47 = vld [vmem:[#allocation5 + $0xc] sm:$0xf]
    %v48 = vld [vmem:[%s2] sm:$0x1]
    %v50 = vlaneseq
    %v51 = vshrl.u32 %v50, 7
    %v52 = vsub.s32 0, %v51
    %v53 = vrot.slane %v48, %v52
    %v59 = vunpack.c.l.b16 %v44
    %v60 = vunpack.c.l.b16 %v45
    %v61 = vunpack.c.l.b16 %v46
    %v62 = vunpack.c.l.b16 %v47
    %v63 = vpack.c.b16 %v60, %v59
    %v64 = vpack.c.b16 %v62, %v61
    %vm67 = vcmask 261120
    %v69 = vsel %vm67, %v43, 0
    %71 = vmatprep.subr.bf16.mxu0 0
    %72 = vmatpush1.bf16.msra.mxu0 %v63
    %73 = vmatprep.subr.bf16.mxu0 0
    %74 = vmatpush1.bf16.msra.mxu0 %v64
    %75 = vmatprep.subr.bf16.mxu0 0
    %76 = vmatpush1.bf16.msra.mxu0 0
    %77 = vmatprep.subr.bf16.mxu0 0
    %78 = vmatpush1.bf16.msra.mxu0 0
    %79 = vmatprep.subr.bf16.mxu0 0
    %80 = vmatpush1.bf16.msra.mxu0 0
    %81 = vmatprep.subr.bf16.mxu0 0
    %82 = vmatpush1.bf16.msra.mxu0 0
    %83 = vmatprep.subr.bf16.mxu0 0
    %84 = vmatpush1.bf16.msra.mxu0 0
    %85 = vmatprep.subr.bf16.mxu0 0
    %86 = vmatpush1.bf16.msra.mxu0 0
    %87 = vmatprep.subr.bf16.mxu0 0
    %88 = vmatpush1.bf16.msra.mxu0 0
    %89 = vmatprep.subr.bf16.mxu0 0
    %90 = vmatpush1.bf16.msra.mxu0 0
    %91 = vmatprep.subr.bf16.mxu0 0
    %92 = vmatpush1.bf16.msra.mxu0 0
    %93 = vmatprep.subr.bf16.mxu0 0
    %94 = vmatpush1.bf16.msra.mxu0 0
    %95 = vmatprep.subr.bf16.mxu0 0
    %96 = vmatpush1.bf16.msra.mxu0 0
    %97 = vmatprep.subr.bf16.mxu0 0
    %98 = vmatpush1.bf16.msra.mxu0 0
    %99 = vmatprep.subr.bf16.mxu0 0
    %100 = vmatpush1.bf16.msra.mxu0 0
    %101 = vmatprep.subr.bf16.mxu0 0
    %102 = vmatpush1.bf16.msra.mxu0 0
    %103 = vmatprep.mubr.bf16.mxu0 0
    %104 = vmatmul.mubr.bf16.gmra.mrb[0].mxu0 %v69
    %v105 = vpop.f32.mrb[0].mxu0
    %v106 = vadd.f32 %v53, %v105
    %v107 = vpop.f32.mrb[0].mxu0
    %v108 = vpop.f32.mrb[0].mxu0
    %v109 = vpop.f32.mrb[0].mxu0
    %110 = vdwg.mxu0
    %vm111 = vcmask 130048
    %112 = vst.msk [vmem:[#allocation7] sm:$0xff] %vm111, %v106
    // Predicated region
    $region22: #{tpu_custom_call.1} parent=1 // pred_check
      _
    $region23: #{tpu_custom_call.1} parent=1 // pred_check_branch
      %114 = sbr.rel (0) target = $region25
    $region24: #{tpu_custom_call.1} parent=1 // pred_region
      %s116 = ssub.s32 128, 128
      %117 = vsyncadd [#allocation4], %s116
      %s119 = sshll.u32 [#allocation7], 4
      %s120 = int_to_ptr.vmem [resolvable:$true] %s119
      %122 = dma.vmem_to_hbm [thread:$0]  %s120, 128, %s3, [#allocation4]
    $region25: #{tpu_custom_call.1} parent=1 // pred_fallthru
      _
    // Predicated region
    $region26: #{tpu_custom_call.1} parent=1 // pred_check
      _
    $region27: #{tpu_custom_call.1} parent=1 // pred_check_branch
      %124 = sbr.rel (0) target = $region29
    $region28: #{tpu_custom_call.1} parent=1 // pred_region
      %125 = dma.done [#allocation4], 128
    $region29: #{tpu_custom_call.1} parent=1 // pred_fallthru
      _
    %126 = vsyncpa [#allocation3], 1
    %127 = vsyncpa [#allocation6], 1
    %128 = vsyncpa [#allocation4], 1

</llo_original>
